<compile_context>
chip_gen: v7x
topology: tpu7x:2x2x1
jax: 0.10.0
libtpu: 0.0.40
codegen_flags: <defaults>
</compile_context>

<pallas_src>
import functools

import jax
import jax.numpy as jnp
from jax import lax
from jax.experimental import pallas as pl
from jax.experimental.pallas import tpu as pltpu


# ---------------------------------------------------------------------------
# One-time probe: pin down pltpu.roll's shift direction on this JAX/Mosaic
# version so the conv tap shifts are correct regardless of convention.
# Runs eagerly (outside jit) on the same default TPU backend; cached.
# ---------------------------------------------------------------------------

def _roll_probe_kernel(x_ref, o_ref):
    o_ref[...] = pltpu.roll(x_ref[...], shift=1, axis=1)


@functools.cache
def _roll_is_forward() -> bool:
    """True if pltpu.roll(x, shift=1) behaves like jnp.roll (out[i] = x[i-1])."""
    x = lax.broadcasted_iota(jnp.float32, (8, 128), 1)
    y = pl.pallas_call(
        _roll_probe_kernel,
        out_shape=jax.ShapeDtypeStruct((8, 128), jnp.float32),
    )(x)
    return bool(y[0, 1] == 0.0)


# ---------------------------------------------------------------------------
# Fused forward kernel (whole batch, whole network, one pallas_call)
# ---------------------------------------------------------------------------

@functools.cache
def _make_fused_kernel(B, L, K, C1, C2, C3, H1, H2, roll_forward):
    pad = K // 2
    BL = B * L
    bias_col = K * C2  # last column of conv_pack holds the folded BN shift

    def kernel(x_ref, conv_ref, fc_ref, o_ref):
        # ----- hoisted per-segment boundary masks for the conv taps --------
        pos = lax.broadcasted_iota(jnp.int32, (1, BL), 1) % L  # pos within seg
        keep = {}
        for k in range(K):
            off = k - pad
            if off > 0:
                keep[off] = pos < (L - off)
            elif off < 0:
                keep[off] = pos >= (-off)

        def shifted(h, off):
            # out[:, l] = h[:, l + off]; zero where l + off leaves its segment
            if off == 0:
                return h
            s = (-off) if roll_forward else off
            rolled = pltpu.roll(h, shift=s % BL, axis=1)
            return jnp.where(keep[off], rolled, 0.0)

        def tap_stack(h):
            # (Cin, BL) -> (K*Cin, BL); block k holds h shifted by (k - pad)
            return jnp.concatenate([shifted(h, k - pad) for k in range(K)],
                                   axis=0)

        x = x_ref[...]                                        # (1, BL)

        # ----- conv1 + BN + ReLU (Cin == 1 -> VPU broadcast FMAs) ----------
        w1 = conv_ref[0:C1, 0:K]                              # (C1, K)
        s1 = conv_ref[0:C1, bias_col:bias_col + 1]            # (C1, 1)
        h = jnp.zeros((C1, BL), jnp.float32)
        for k in range(K):
            h = h + w1[:, k:k + 1] * shifted(x, k - pad)      # (C1,1)*(1,BL)
        h = jnp.maximum(h + s1, 0.0)

        # ----- conv2 + BN + ReLU (K taps folded into one MXU matmul) -------
        w2 = conv_ref[C1:C1 + C2, 0:K * C1]                   # (C2, K*C1)
        s2 = conv_ref[C1:C1 + C2, bias_col:bias_col + 1]      # (C2, 1)
        h = jnp.maximum(
            jnp.dot(w2, tap_stack(h),
                    preferred_element_type=jnp.float32) + s2, 0.0)

        # ----- conv3 + BN + ReLU -------------------------------------------
        w3 = conv_ref[C1 + C2:C1 + C2 + C3, 0:K * C2]         # (C3, K*C2)
        s3 = conv_ref[C1 + C2:C1 + C2 + C3, bias_col:bias_col + 1]
        h = jnp.maximum(
            jnp.dot(w3, tap_stack(h),
                    preferred_element_type=jnp.float32) + s3, 0.0)   # (C3, BL)

        # ----- global average pool over each length-L segment -> (B, C3) ---
        seg_of_lane = lax.broadcasted_iota(jnp.int32, (B, BL), 1) // L
        batch_row = lax.broadcasted_iota(jnp.int32, (B, BL), 0)
        pool_sel = jnp.where(batch_row == seg_of_lane,
                             jnp.float32(1.0 / L), jnp.float32(0.0))  # (B, BL)
        P = jnp.einsum('bl,cl->bc', pool_sel, h,
                       preferred_element_type=jnp.float32)            # (B, C3)

        # ----- fc1/ReLU, fc2/ReLU, fc3 (Dropout = identity in eval mode) ---
        r1, r2, r3 = C3, C3 + H1, C3 + H1 + H2
        w1t = fc_ref[0:r1, 0:H1]                              # (C3, H1)
        w2t = fc_ref[r1:r2, 0:H2]                             # (H1, H2)
        w3t = fc_ref[r2:r3, 0:1]                              # (H2, 1)
        fb1 = fc_ref[r3:r3 + 1, 0:H1]                         # (1, H1)
        fb2 = fc_ref[r3 + 1:r3 + 2, 0:H2]                     # (1, H2)
        fb3 = fc_ref[r3 + 2:r3 + 3, 0:1]                      # (1, 1)

        z = jnp.maximum(
            jnp.dot(P, w1t, preferred_element_type=jnp.float32) + fb1, 0.0)
        z = jnp.maximum(
            jnp.dot(z, w2t, preferred_element_type=jnp.float32) + fb2, 0.0)
        z = jnp.dot(z, w3t, preferred_element_type=jnp.float32) + fb3   # (B,1)

        # single dense lane-wide store; wrapper reads column 0
        o_ref[...] = jnp.broadcast_to(z, (B, o_ref.shape[1]))

    return kernel


@functools.partial(jax.jit, static_argnums=(3, 4))
def _forward_jit(x, conv_pack, fc_pack, config, roll_forward):
    K, C1, C2, C3, H1, H2 = config
    B, L = x.shape
    BL = B * L
    kernel = _make_fused_kernel(B, L, K, C1, C2, C3, H1, H2, roll_forward)

    conv_flops = 2 * BL * K * (C1 + C1 * C2 + C2 * C3)
    pool_flops = 2 * BL * C3 * B
    fc_flops = 2 * B * (C3 * H1 + H1 * H2 + H2)
    bytes_accessed = 4 * (BL + conv_pack.size + fc_pack.size + B * 128)

    out = pl.pallas_call(
        kernel,
        out_shape=jax.ShapeDtypeStruct((B, 128), jnp.float32),
        cost_estimate=pl.CostEstimate(
            flops=int(conv_flops + pool_flops + fc_flops),
            transcendentals=0,
            bytes_accessed=int(bytes_accessed)),
    )(x.reshape(1, BL), conv_pack, fc_pack)
    return out[:, 0]


def cnn_forward(x, params):
    """x: (B, input_dim) float32 -> (B,) float32 (eval-mode forward)."""
    return _forward_jit(x, params["conv_pack"], params["fc_pack"],
                        params["config"], _roll_is_forward())


# ---------------------------------------------------------------------------
# Deterministic parameter init (matches CNN.__init__ distributions), BN fold,
# and packing into two flat parameter buffers.
# ---------------------------------------------------------------------------

def init_params(key, num_channels=8, kernel_size=3, eps=1e-5):
    K = kernel_size
    C1, C2, C3 = num_channels, num_channels * 2, num_channels * 4
    H1, H2 = 256, 64
    conv_dims = [(1, C1), (C1, C2), (C2, C3)]
    keys = jax.random.split(key, 6)

    ref_convs, folded = [], []
    for i, (cin, cout) in enumerate(conv_dims):
        # kaiming_normal_(mode='fan_out', nonlinearity='relu')
        std = (2.0 / (cout * K)) ** 0.5
        w_pt = std * jax.random.normal(keys[i], (cout, cin, K), jnp.float32)
        conv_b = jnp.zeros((cout,), jnp.float32)
        # BatchNorm1d eval-mode fold (init: gamma=1, beta=0, mean=0, var=1)
        gamma = jnp.ones((cout,), jnp.float32)
        beta = jnp.zeros((cout,), jnp.float32)
        r_mean = jnp.zeros((cout,), jnp.float32)
        r_var = jnp.ones((cout,), jnp.float32)
        scale = gamma * lax.rsqrt(r_var + eps)
        shift = beta + (conv_b - r_mean) * scale
        ref_convs.append({"w_pt": w_pt, "scale": scale, "shift": shift})
        # fold BN scale into conv weights; reorder (O, I, K) -> (O, K, I)
        # so columns are [tap0 x Cin, tap1 x Cin, ...] matching tap_stack.
        w_f = (w_pt * scale[:, None, None]).transpose(0, 2, 1).reshape(cout, K * cin)
        folded.append((w_f, shift))

    # --- pack conv weights + BN shifts into one (Ctot, K*C2 + 1) buffer ----
    Ctot = C1 + C2 + C3
    conv_cols = K * C2 + 1                       # widest weight row + shift col
    conv_pack = jnp.zeros((Ctot, conv_cols), jnp.float32)
    row = 0
    for w_f, shift in folded:
        co, wc = w_f.shape
        conv_pack = conv_pack.at[row:row + co, 0:wc].set(w_f)
        conv_pack = conv_pack.at[row:row + co, conv_cols - 1].set(shift)
        row += co

    # --- FC layers: normal(0, 0.01) weights, zero biases --------------------
    def linear(k, fan_in, fan_out):
        w = 0.01 * jax.random.normal(k, (fan_out, fan_in), jnp.float32)
        b = jnp.zeros((fan_out,), jnp.float32)
        return w, b

    fc1_w, fc1_b = linear(keys[3], C3, H1)
    fc2_w, fc2_b = linear(keys[4], H1, H2)
    fc3_w, fc3_b = linear(keys[5], H2, 1)

    # pack transposed FC weights + biases into one (C3+H1+H2+3, H1) buffer
    fc_cols = max(H1, H2, 1)
    fc_rows = C3 + H1 + H2 + 3
    fc_pack = jnp.zeros((fc_rows, fc_cols), jnp.float32)
    fc_pack = fc_pack.at[0:C3, 0:H1].set(fc1_w.T)
    fc_pack = fc_pack.at[C3:C3 + H1, 0:H2].set(fc2_w.T)
    fc_pack = fc_pack.at[C3 + H1:C3 + H1 + H2, 0:1].set(fc3_w.T)
    fc_pack = fc_pack.at[C3 + H1 + H2, 0:H1].set(fc1_b)
    fc_pack = fc_pack.at[C3 + H1 + H2 + 1, 0:H2].set(fc2_b)
    fc_pack = fc_pack.at[C3 + H1 + H2 + 2, 0:1].set(fc3_b)

    return {
        "config": (K, C1, C2, C3, H1, H2),
        "conv_pack": conv_pack,
        "fc_pack": fc_pack,
        "ref": {"convs": ref_convs,
                "fc1_w": fc1_w, "fc1_b": fc1_b,
                "fc2_w": fc2_w, "fc2_b": fc2_b,
                "fc3_w": fc3_w, "fc3_b": fc3_b},
    }


# ---------------------------------------------------------------------------
# Pure-JAX reference (PyTorch NCL layout) for correctness check
# ---------------------------------------------------------------------------

def reference_forward(x, params):
    K = params["config"][0]
    pad = K // 2
    h = x[:, None, :]                                   # (B, 1, L)
    for layer in params["ref"]["convs"]:
        h = lax.conv_general_dilated(
            h, layer["w_pt"], window_strides=(1,), padding=[(pad, pad)],
            dimension_numbers=("NCH", "OIH", "NCH"))
        h = h * layer["scale"][None, :, None] + layer["shift"][None, :, None]
        h = jnp.maximum(h, 0.0)
    h = jnp.mean(h, axis=-1)                            # (B, C3) adaptive pool(1)
    r = params["ref"]
    h = jnp.maximum(h @ r["fc1_w"].T + r["fc1_b"], 0.0)
    h = jnp.maximum(h @ r["fc2_w"].T + r["fc2_b"], 0.0)
    h = h @ r["fc3_w"].T + r["fc3_b"]
    return h[:, 0]


if __name__ == "__main__":
    key = jax.random.PRNGKey(0)
    k_x, k_p = jax.random.split(key)

    B, INPUT_DIM = 2, 256            # small shapes; INPUT_DIM a multiple of 128
    NUM_CHANNELS, KERNEL_SIZE = 8, 3

    x = jax.random.normal(k_x, (B, INPUT_DIM), jnp.float32)
    params = init_params(k_p, num_channels=NUM_CHANNELS, kernel_size=KERNEL_SIZE)

    out = jax.block_until_ready(cnn_forward(x, params))
    ref = jax.block_until_ready(reference_forward(x, params))

    assert out.shape == (B,), out.shape
    assert jnp.allclose(out, ref, atol=1e-4, rtol=1e-4), (out, ref)
    print("KERNEL_OK")
</pallas_src>

<mosaic_0001>
module attributes {stable_mosaic.version = 11 : i64} {
  func.func @_roll_probe_kernel(%arg0: memref<8x128xf32, #tpu.memory_space<vmem>>, %arg1: memref<8x128xf32, #tpu.memory_space<vmem>>) attributes {dimension_semantics = [], scalar_prefetch = 0 : i64, scratch_operands = 0 : i64, tpu.core_type = #tpu.core_type<tc>} {
    %c0 = arith.constant 0 : index
    %c0_0 = arith.constant 0 : index
    %0 = vector.load %arg0[%c0, %c0_0] : memref<8x128xf32, #tpu.memory_space<vmem>>, vector<8x128xf32>
    %c1_i32 = arith.constant 1 : i32
    %1 = tpu.dynamic_rotate %0 by %c1_i32 dim 1 : vector<8x128xf32>, i32 -> vector<8x128xf32>
    %c0_1 = arith.constant 0 : index
    %c0_2 = arith.constant 0 : index
    %2 = vector.load %arg1[%c0_1, %c0_2] : memref<8x128xf32, #tpu.memory_space<vmem>>, vector<8x128xf32>
    tpu.vector_store %arg1[%c0_1, %c0_2], %1 {strides = array<i32>} : memref<8x128xf32, #tpu.memory_space<vmem>>, vector<8x128xf32>,
    return
  }
}

</mosaic_0001>

<llo_original>
// kernel: tpu_custom_call.1
$region0: #{tpu_custom_call.1}
  #allocation0 [shape = 'u32[]', space=smem, size = 0x4, offset = 0x4, fixed_abs, tag = 'smem constant byte address 0x4 - core index']
  #allocation1 [shape = 'u32[144,128]{1,0:T(1,128)}', space=vmem, size = 0x12000, scoped, tag = 'internal scratch']
  %s0 = inlined_call_operand.hbm [shape: f32[8,128], index: 0, kind: input, shape index: {}]
  %s1 = inlined_call_operand.hbm [shape: f32[8,128], index: 1, kind: output, shape index: {}]
  %s2 = sld [smem:[#allocation0]]
  $region18: #{tpu_custom_call.1} parent=0
    _
  %s4 = ssub.s32 1, %s2
  %s5 = scalar_select 0, %s4, %s2
  $region1: #{tpu_custom_call.1} parent=0
    #allocation2 [shape = 'u8[4096]{0}', space=vmem, size = 0x1000, scoped, tag = 'input window, operand 0, single buffered']
    #allocation3 [shape = 's32[1]{0}', space=sflag, size = 0x4, scoped, tag = 'scoped memory for tpu_custom_call.1']
    #allocation4 [shape = 's32[1]{0}', space=sflag, size = 0x4, scoped, tag = 'scoped memory for tpu_custom_call.1']
    #allocation5 [shape = 'u8[4096]{0}', space=vmem, size = 0x1000, scoped, tag = 'output window, operand 0, single buffered']
    %6 = vsyncpa [#allocation3], 0
    %7 = vsyncpa [#allocation4], 0
    // Predicated region
    $region2: #{tpu_custom_call.1} parent=1 // pred_check
      _
    $region3: #{tpu_custom_call.1} parent=1 // pred_check_branch
      %9 = sbr.rel (0) target = $region5
    $region4: #{tpu_custom_call.1} parent=1 // pred_region
      %s11 = ssub.s32 128, 128
      %12 = vsyncadd [#allocation3], %s11
      %s14 = sshll.u32 [#allocation2], 4
      %s15 = int_to_ptr.vmem [resolvable:$true] %s14
      %17 = dma.hbm_to_vmem [thread:$0]  %s0, 128, %s15, [#allocation3]
    $region5: #{tpu_custom_call.1} parent=1 // pred_fallthru
      _
    // Predicated region
    $region6: #{tpu_custom_call.1} parent=1 // pred_check
      _
    $region7: #{tpu_custom_call.1} parent=1 // pred_check_branch
      %19 = sbr.rel (0) target = $region9
    $region8: #{tpu_custom_call.1} parent=1 // pred_region
      %20 = dma.done [#allocation3], 128
    $region9: #{tpu_custom_call.1} parent=1 // pred_fallthru
      _
    %v21 = vld [vmem:[#allocation2] sm:$0xff]
    %22 = vrot.lane.b32.xlu0 %v21, 1
    %v23 = vpop.permute.xlu0 %22
    %24 = vst [vmem:[#allocation5] sm:$0xff] %v23
    // Predicated region
    $region10: #{tpu_custom_call.1} parent=1 // pred_check
      _
    $region11: #{tpu_custom_call.1} parent=1 // pred_check_branch
      %26 = sbr.rel (0) target = $region13
    $region12: #{tpu_custom_call.1} parent=1 // pred_region
      %s28 = ssub.s32 128, 128
      %29 = vsyncadd [#allocation4], %s28
      %s31 = sshll.u32 [#allocation5], 4
      %s32 = int_to_ptr.vmem [resolvable:$true] %s31
      %34 = dma.vmem_to_hbm [thread:$0]  %s32, 128, %s1, [#allocation4]
    $region13: #{tpu_custom_call.1} parent=1 // pred_fallthru
      _
    // Predicated region
    $region14: #{tpu_custom_call.1} parent=1 // pred_check
      _
    $region15: #{tpu_custom_call.1} parent=1 // pred_check_branch
      %36 = sbr.rel (0) target = $region17
    $region16: #{tpu_custom_call.1} parent=1 // pred_region
      %37 = dma.done [#allocation4], 128
    $region17: #{tpu_custom_call.1} parent=1 // pred_fallthru
      _
    %38 = vsyncpa [#allocation3], 1
    %39 = vsyncpa [#allocation4], 1

</llo_original>
